<compile_context>
chip_gen: v6e
topology: v6e:2x2x1
jax: 0.10.0
libtpu: 0.0.40
codegen_flags: <defaults>
</compile_context>

<pallas_src>
import functools

import jax
import jax.numpy as jnp
from jax.experimental import pallas as pl
from jax.experimental.pallas import tpu as pltpu


def _round_up(x, m):
    return ((x + m - 1) // m) * m


def _projection_head_kernel(x_ref, w1_ref, w2_ref, gamma_ref, beta_ref, o_ref,
                            *, eps, n_valid, approximate_gelu):
    # Keep MXU operands in their storage dtype (bf16 stays bf16); accumulate in f32.
    x = x_ref[...]                        # (tm, din_p)
    w1 = w1_ref[...]                      # (din_p, dout_p)
    w2 = w2_ref[...]                      # (dout_p, dout_p)

    # embed1 = linear1(x)
    embed1 = jnp.dot(x, w1, preferred_element_type=jnp.float32)      # f32 (tm, dout_p)

    # GELU: exact erf form matches PyTorch's default F.gelu; tanh approx optional.
    if approximate_gelu:
        g = jax.nn.gelu(embed1, approximate=True)
    else:
        g = 0.5 * embed1 * (1.0 + jax.lax.erf(embed1 * jnp.float32(0.7071067811865476)))

    # embed2 = dropout(linear2(gelu(embed1)))  -- dropout is identity in eval mode.
    # TODO(synk): training-mode dropout (stochastic mask + 1/(1-p) scaling) not implemented.
    embed2 = jnp.dot(g.astype(w2.dtype), w2, preferred_element_type=jnp.float32)

    # layer_norm(embed1 + embed2) over the true (unpadded) feature count.
    s = embed1 + embed2                   # padded feature columns are exactly 0
    inv_n = jnp.float32(1.0 / n_valid)
    mean = jnp.sum(s, axis=-1, keepdims=True) * inv_n
    centered = s - mean
    if n_valid != s.shape[-1]:            # mask padded columns out of the variance
        col = jax.lax.broadcasted_iota(jnp.int32, s.shape, 1)
        centered = jnp.where(col < n_valid, centered, 0.0)
    var = jnp.sum(centered * centered, axis=-1, keepdims=True) * inv_n
    inv = jax.lax.rsqrt(var + jnp.float32(eps))
    normed = centered * inv

    gamma = gamma_ref[...].astype(jnp.float32)    # (1, dout_p)
    beta = beta_ref[...].astype(jnp.float32)      # (1, dout_p)
    o_ref[...] = (normed * gamma + beta).astype(o_ref.dtype)


def projection_head(x, w1_t, w2_t, gamma, beta, *, eps=1e-5, tm=None,
                    approximate_gelu=False):
    """x: (B, dim_in); w1_t: (dim_in, dim_out) = linear1.weight.T;
    w2_t: (dim_out, dim_out) = linear2.weight.T; gamma, beta: (dim_out,).
    Returns (B, dim_out)."""
    B, dim_in = x.shape
    assert w1_t.shape[0] == dim_in
    dim_out = w1_t.shape[1]

    LANE = 128
    din_p = _round_up(dim_in, LANE)
    dout_p = _round_up(dim_out, LANE)
    sub = 16 if x.dtype == jnp.bfloat16 else 8            # sublane multiple

    act_bytes = jnp.dtype(x.dtype).itemsize
    w_bytes = jnp.dtype(w1_t.dtype).itemsize
    # Weights are grid-invariant (constant index_map) but conservatively counted as
    # double-buffered.  (pl.Buffered(1) on the weight specs would halve this; skipped
    # here for portability across jax versions.)
    weight_vmem = 2 * (din_p * dout_p + dout_p * dout_p) * w_bytes

    if tm is None:
        # Largest row tile (<=512) whose double-buffered x/out tiles plus f32
        # intermediates fit a conservative cross-generation VMEM budget.
        budget = max((48 << 20) - weight_vmem, 4 << 20)
        tm = min(_round_up(B, sub), 512)
        while tm > sub:
            per_tile = 2 * tm * (din_p + dout_p) * act_bytes + 4 * tm * dout_p * 4
            if per_tile <= budget:
                break
            tm = max(sub, tm // 2)
    tm = _round_up(tm, sub)
    B_p = _round_up(B, tm)

    # Zero-pad to lane-dense / tile-aligned shapes (padding sliced off at the end).
    xp = jnp.pad(x, ((0, B_p - B), (0, din_p - dim_in)))
    w1p = jnp.pad(w1_t, ((0, din_p - dim_in), (0, dout_p - dim_out)))
    w2p = jnp.pad(w2_t, ((0, dout_p - dim_out), (0, dout_p - dim_out)))
    gp = jnp.pad(gamma, (0, dout_p - dim_out)).reshape(1, dout_p)
    bp = jnp.pad(beta, (0, dout_p - dim_out)).reshape(1, dout_p)

    vmem_needed = (weight_vmem
                   + 2 * tm * (din_p + dout_p) * act_bytes   # double-buffered x/out tiles
                   + 4 * tm * dout_p * 4                      # f32 intermediates
                   + 4 * dout_p * w_bytes)                    # gamma/beta
    vmem_limit = int(min(max(vmem_needed + (4 << 20), 32 << 20), 60 << 20))

    # TODO(synk): for very large weights (w1+w2 f32 >~40 MiB, e.g. dim_out >= 4096) add a
    # K-reduction grid axis over dim_in with an accumulator scratch instead of keeping
    # both full weights resident.

    kernel = functools.partial(_projection_head_kernel, eps=float(eps),
                               n_valid=dim_out, approximate_gelu=approximate_gelu)

    out = pl.pallas_call(
        kernel,
        out_shape=jax.ShapeDtypeStruct((B_p, dout_p), x.dtype),
        grid_spec=pltpu.PrefetchScalarGridSpec(
            num_scalar_prefetch=0,
            grid=(B_p // tm,),
            in_specs=[
                pl.BlockSpec((tm, din_p), lambda i: (i, 0)),        # x row tile (pipelined)
                pl.BlockSpec((din_p, dout_p), lambda i: (0, 0)),    # W1^T (grid-invariant)
                pl.BlockSpec((dout_p, dout_p), lambda i: (0, 0)),   # W2^T (grid-invariant)
                pl.BlockSpec((1, dout_p), lambda i: (0, 0)),        # gamma
                pl.BlockSpec((1, dout_p), lambda i: (0, 0)),        # beta
            ],
            out_specs=pl.BlockSpec((tm, dout_p), lambda i: (i, 0)),
        ),
        compiler_params=pltpu.CompilerParams(
            dimension_semantics=("parallel",),
            vmem_limit_bytes=vmem_limit,
        ),
    )(xp, w1p, w2p, gp, bp)

    return out[:B, :dim_out]


def _reference(x, w1_t, w2_t, gamma, beta, eps=1e-5):
    embed1 = x @ w1_t
    g = 0.5 * embed1 * (1.0 + jax.lax.erf(embed1 / jnp.sqrt(2.0)))
    embed2 = g @ w2_t
    s = embed1 + embed2
    mean = jnp.mean(s, axis=-1, keepdims=True)
    var = jnp.mean((s - mean) ** 2, axis=-1, keepdims=True)
    return (s - mean) / jnp.sqrt(var + eps) * gamma + beta


if __name__ == "__main__":
    key = jax.random.PRNGKey(0)
    k_x, k_w1, k_w2 = jax.random.split(key, 3)

    B, dim_in, dim_out = 8, 32, 64  # small shapes consistent with the module

    x = jax.random.normal(k_x, (B, dim_in), dtype=jnp.float32)

    # Deterministic parameter init (nn.Linear-style uniform bounds), stored pre-transposed.
    bound1 = 1.0 / jnp.sqrt(dim_in)
    bound2 = 1.0 / jnp.sqrt(dim_out)
    w1_t = jax.random.uniform(k_w1, (dim_in, dim_out), jnp.float32, -bound1, bound1)
    w2_t = jax.random.uniform(k_w2, (dim_out, dim_out), jnp.float32, -bound2, bound2)
    gamma = jnp.ones((dim_out,), jnp.float32)   # LayerNorm weight init
    beta = jnp.zeros((dim_out,), jnp.float32)   # LayerNorm bias init

    out = projection_head(x, w1_t, w2_t, gamma, beta)
    out = jax.block_until_ready(out)

    ref = _reference(x, w1_t, w2_t, gamma, beta)
    assert out.shape == (B, dim_out)
    assert jnp.allclose(out, ref, atol=1e-5, rtol=1e-5), "mismatch vs. JAX reference"

    print("KERNEL_OK")
</pallas_src>

<mosaic_0001>
module attributes {stable_mosaic.version = 11 : i64} {
  func.func @_projection_head_kernel(%arg0: i32, %arg1: memref<8x128xf32, #tpu.memory_space<vmem>>, %arg2: memref<128x128xf32, #tpu.memory_space<vmem>>, %arg3: memref<128x128xf32, #tpu.memory_space<vmem>>, %arg4: memref<1x128xf32, #tpu.memory_space<vmem>>, %arg5: memref<1x128xf32, #tpu.memory_space<vmem>>, %arg6: memref<8x128xf32, #tpu.memory_space<vmem>>) attributes {dimension_semantics = [#tpu.dimension_semantics<parallel>], iteration_bounds = array<i64: 1>, scalar_prefetch = 0 : i64, scratch_operands = 0 : i64, tpu.core_type = #tpu.core_type<tc>, window_params = [{transform_indices = @transform_0, window_bounds = array<i64: 8, 128>}, {pipeline_mode = #tpu.pipeline_mode<synchronous>, transform_indices = @transform_1, window_bounds = array<i64: 128, 128>}, {pipeline_mode = #tpu.pipeline_mode<synchronous>, transform_indices = @transform_2, window_bounds = array<i64: 128, 128>}, {pipeline_mode = #tpu.pipeline_mode<synchronous>, transform_indices = @transform_3, window_bounds = array<i64: 1, 128>}, {pipeline_mode = #tpu.pipeline_mode<synchronous>, transform_indices = @transform_4, window_bounds = array<i64: 1, 128>}, {transform_indices = @transform_5, window_bounds = array<i64: 8, 128>}]} {
    %c0 = arith.constant 0 : index
    %c0_0 = arith.constant 0 : index
    %0 = vector.load %arg1[%c0, %c0_0] : memref<8x128xf32, #tpu.memory_space<vmem>>, vector<8x128xf32>
    %c0_1 = arith.constant 0 : index
    %c0_2 = arith.constant 0 : index
    %1 = vector.load %arg2[%c0_1, %c0_2] : memref<128x128xf32, #tpu.memory_space<vmem>>, vector<128x128xf32>
    %c0_3 = arith.constant 0 : index
    %c0_4 = arith.constant 0 : index
    %2 = vector.load %arg3[%c0_3, %c0_4] : memref<128x128xf32, #tpu.memory_space<vmem>>, vector<128x128xf32>
    %cst = arith.constant dense<0.000000e+00> : vector<8x128xf32>
    %3 = tpu.matmul %0, %1, %cst {dimension_numbers = #tpu.dot_dimension_numbers<[1], [0], [0], [1], [0, 0, 1, 1], [], []>} : vector<8x128xf32>, vector<128x128xf32>, vector<8x128xf32> -> vector<8x128xf32>
    %cst_5 = arith.constant 5.000000e-01 : f32
    %4 = vector.broadcast %cst_5 : f32 to vector<8x128xf32>
    %5 = arith.mulf %4, %3 : vector<8x128xf32>
    %cst_6 = arith.constant 0.707106769 : f32
    %6 = vector.broadcast %cst_6 : f32 to vector<8x128xf32>
    %7 = arith.mulf %3, %6 : vector<8x128xf32>
    %8 = math.erf %7 : vector<8x128xf32>
    %cst_7 = arith.constant 1.000000e+00 : f32
    %9 = vector.broadcast %cst_7 : f32 to vector<8x128xf32>
    %10 = arith.addf %9, %8 : vector<8x128xf32>
    %11 = arith.mulf %5, %10 : vector<8x128xf32>
    %cst_8 = arith.constant dense<0.000000e+00> : vector<8x128xf32>
    %12 = tpu.matmul %11, %2, %cst_8 {dimension_numbers = #tpu.dot_dimension_numbers<[1], [0], [0], [1], [0, 0, 1, 1], [], []>} : vector<8x128xf32>, vector<128x128xf32>, vector<8x128xf32> -> vector<8x128xf32>
    %13 = arith.addf %3, %12 : vector<8x128xf32>
    %cst_9 = arith.constant dense<0.000000e+00> : vector<8xf32>
    %14 = vector.multi_reduction <add>, %13, %cst_9 [1] : vector<8x128xf32> to vector<8xf32>
    %15 = vector.shape_cast %14 : vector<8xf32> to vector<8x1xf32>
    %cst_10 = arith.constant 1.562500e-02 : f32
    %16 = vector.broadcast %cst_10 : f32 to vector<8x1xf32>
    %17 = arith.mulf %15, %16 : vector<8x1xf32>
    %18 = vector.broadcast %17 : vector<8x1xf32> to vector<8x128xf32>
    %19 = arith.subf %13, %18 : vector<8x128xf32>
    %20 = tpu.iota {dimensions = array<i32: 1>} : vector<8x128xi32>
    %c64_i32 = arith.constant 64 : i32
    %21 = vector.broadcast %c64_i32 : i32 to vector<8x128xi32>
    %22 = arith.cmpi slt, %20, %21 : vector<8x128xi32>
    %cst_11 = arith.constant 0.000000e+00 : f32
    %23 = vector.broadcast %cst_11 : f32 to vector<8x128xf32>
    %24 = arith.select %22, %19, %23 : vector<8x128xi1>, vector<8x128xf32>
    %25 = arith.mulf %24, %24 : vector<8x128xf32>
    %cst_12 = arith.constant dense<0.000000e+00> : vector<8xf32>
    %26 = vector.multi_reduction <add>, %25, %cst_12 [1] : vector<8x128xf32> to vector<8xf32>
    %27 = vector.shape_cast %26 : vector<8xf32> to vector<8x1xf32>
    %cst_13 = arith.constant 1.562500e-02 : f32
    %28 = vector.broadcast %cst_13 : f32 to vector<8x1xf32>
    %29 = arith.mulf %27, %28 : vector<8x1xf32>
    %cst_14 = arith.constant 9.99999974E-6 : f32
    %30 = vector.broadcast %cst_14 : f32 to vector<8x1xf32>
    %31 = arith.addf %29, %30 : vector<8x1xf32>
    %32 = math.rsqrt %31 : vector<8x1xf32>
    %33 = vector.broadcast %32 : vector<8x1xf32> to vector<8x128xf32>
    %34 = arith.mulf %24, %33 : vector<8x128xf32>
    %c0_15 = arith.constant 0 : index
    %c0_16 = arith.constant 0 : index
    %35 = vector.load %arg4[%c0_15, %c0_16] : memref<1x128xf32, #tpu.memory_space<vmem>>, vector<1x128xf32>
    %c0_17 = arith.constant 0 : index
    %c0_18 = arith.constant 0 : index
    %36 = vector.load %arg5[%c0_17, %c0_18] : memref<1x128xf32, #tpu.memory_space<vmem>>, vector<1x128xf32>
    %37 = vector.broadcast %35 : vector<1x128xf32> to vector<8x128xf32>
    %38 = arith.mulf %34, %37 : vector<8x128xf32>
    %39 = vector.broadcast %36 : vector<1x128xf32> to vector<8x128xf32>
    %40 = arith.addf %38, %39 : vector<8x128xf32>
    %c0_19 = arith.constant 0 : index
    %c0_20 = arith.constant 0 : index
    %41 = vector.load %arg6[%c0_19, %c0_20] : memref<8x128xf32, #tpu.memory_space<vmem>>, vector<8x128xf32>
    tpu.vector_store %arg6[%c0_19, %c0_20], %40 {strides = array<i32>} : memref<8x128xf32, #tpu.memory_space<vmem>>, vector<8x128xf32>,
    return
  }
  func.func @transform_0(%arg0: i32) -> (i32, i32) {
    %c0_i32 = arith.constant 0 : i32
    %c0_i32_0 = arith.constant 0 : i32
    return %arg0, %c0_i32 : i32, i32
  }
  func.func @transform_1(%arg0: i32) -> (i32, i32) {
    %c0_i32 = arith.constant 0 : i32
    %c0_i32_0 = arith.constant 0 : i32
    %c0_i32_1 = arith.constant 0 : i32
    return %c0_i32, %c0_i32_0 : i32, i32
  }
  func.func @transform_2(%arg0: i32) -> (i32, i32) {
    %c0_i32 = arith.constant 0 : i32
    %c0_i32_0 = arith.constant 0 : i32
    %c0_i32_1 = arith.constant 0 : i32
    return %c0_i32, %c0_i32_0 : i32, i32
  }
  func.func @transform_3(%arg0: i32) -> (i32, i32) {
    %c0_i32 = arith.constant 0 : i32
    %c0_i32_0 = arith.constant 0 : i32
    %c0_i32_1 = arith.constant 0 : i32
    return %c0_i32, %c0_i32_0 : i32, i32
  }
  func.func @transform_4(%arg0: i32) -> (i32, i32) {
    %c0_i32 = arith.constant 0 : i32
    %c0_i32_0 = arith.constant 0 : i32
    %c0_i32_1 = arith.constant 0 : i32
    return %c0_i32, %c0_i32_0 : i32, i32
  }
  func.func @transform_5(%arg0: i32) -> (i32, i32) {
    %c0_i32 = arith.constant 0 : i32
    %c0_i32_0 = arith.constant 0 : i32
    return %arg0, %c0_i32 : i32, i32
  }
}

</mosaic_0001>

<llo_original>
// kernel: tpu_custom_call.1
$region0: #{tpu_custom_call.1}
  #allocation0 [shape = 'u32[]', space=smem, size = 0x4, offset = 0x4, fixed_abs, tag = 'smem constant byte address 0x4 - core index']
  #allocation1 [shape = 'u32[144,128]{1,0:T(1,128)}', space=vmem, size = 0x12000, scoped, tag = 'internal scratch']
  %s0 = inlined_call_operand.hbm [shape: f32[8,128], index: 0, kind: input, shape index: {}]
  %s1 = inlined_call_operand.hbm [shape: f32[128,128], index: 1, kind: input, shape index: {}]
  %s2 = inlined_call_operand.hbm [shape: f32[128,128], index: 2, kind: input, shape index: {}]
  %s3 = inlined_call_operand.vmem [shape: f32[1,128], index: 3, kind: input, shape index: {}]
  %s4 = inlined_call_operand.vmem [shape: f32[1,128], index: 4, kind: input, shape index: {}]
  %s5 = inlined_call_operand.hbm [shape: f32[8,128], index: 5, kind: output, shape index: {}]
  %s6 = sld [smem:[#allocation0]]
  $region42: #{tpu_custom_call.1} parent=0
    _
  %s8 = ssub.s32 1, %s6
  %s9 = scalar_select 0, %s8, %s6
  $region1: #{tpu_custom_call.1} parent=0
    #allocation2 [shape = 'u8[4096]{0}', space=vmem, size = 0x1000, scoped, tag = 'input window, operand 0, single buffered']
    #allocation3 [shape = 's32[1]{0}', space=sflag, size = 0x4, scoped, tag = 'scoped memory for tpu_custom_call.1']
    #allocation4 [shape = 's32[1]{0}', space=sflag, size = 0x4, scoped, tag = 'scoped memory for tpu_custom_call.1']
    #allocation5 [shape = 'u8[65536]{0}', space=vmem, size = 0x10000, scoped, tag = 'input window, operand 1, single buffered']
    #allocation6 [shape = 's32[1]{0}', space=sflag, size = 0x4, scoped, tag = 'scoped memory for tpu_custom_call.1']
    #allocation7 [shape = 'u8[65536]{0}', space=vmem, size = 0x10000, scoped, tag = 'input window, operand 2, single buffered']
    #allocation8 [shape = 'u8[4096]{0}', space=vmem, size = 0x1000, scoped, tag = 'output window, operand 0, single buffered']
    %10 = vsyncpa [#allocation3], 0
    %11 = vsyncpa [#allocation6], 0
    %12 = vsyncpa [#allocation4], 0
    // Predicated region
    $region2: #{tpu_custom_call.1} parent=1 // pred_check
      _
    $region3: #{tpu_custom_call.1} parent=1 // pred_check_branch
      %14 = sbr.rel (0) target = $region5
    $region4: #{tpu_custom_call.1} parent=1 // pred_region
      %s16 = ssub.s32 128, 128
      %17 = vsyncadd [#allocation3], %s16
      %s19 = sshll.u32 [#allocation2], 4
      %s20 = int_to_ptr.vmem [resolvable:$true] %s19
      %22 = dma.hbm_to_vmem [thread:$0]  %s0, 128, %s20, [#allocation3]
    $region5: #{tpu_custom_call.1} parent=1 // pred_fallthru
      _
    // Predicated region
    $region6: #{tpu_custom_call.1} parent=1 // pred_check
      _
    $region7: #{tpu_custom_call.1} parent=1 // pred_check_branch
      %24 = sbr.rel (0) target = $region9
    $region8: #{tpu_custom_call.1} parent=1 // pred_region
      %s26 = ssub.s32 2048, 2048
      %27 = vsyncadd [#allocation6], %s26
      %s28 = sshll.u32 [#allocation5], 4
      %s29 = int_to_ptr.vmem [resolvable:$true] %s28
      %34 = dma.hbm_to_vmem [thread:$0]  %s1, 2048, %s29, [#allocation6], 128, 128, 8
    $region9: #{tpu_custom_call.1} parent=1 // pred_fallthru
      _
    // Predicated region
    $region10: #{tpu_custom_call.1} parent=1 // pred_check
      _
    $region11: #{tpu_custom_call.1} parent=1 // pred_check_branch
      %36 = sbr.rel (0) target = $region13
    $region12: #{tpu_custom_call.1} parent=1 // pred_region
      %s38 = ssub.s32 2048, 2048
      %39 = vsyncadd [#allocation6], %s38
      %s40 = sshll.u32 [#allocation7], 4
      %s41 = int_to_ptr.vmem [resolvable:$true] %s40
      %46 = dma.hbm_to_vmem [thread:$0]  %s2, 2048, %s41, [#allocation6], 128, 128, 8
    $region13: #{tpu_custom_call.1} parent=1 // pred_fallthru
      _
    // Predicated region
    $region14: #{tpu_custom_call.1} parent=1 // pred_check
      _
    $region15: #{tpu_custom_call.1} parent=1 // pred_check_branch
      %48 = sbr.rel (0) target = $region17
    $region16: #{tpu_custom_call.1} parent=1 // pred_region
      _
    $region17: #{tpu_custom_call.1} parent=1 // pred_fallthru
      _
    // Predicated region
    $region18: #{tpu_custom_call.1} parent=1 // pred_check
      _
    $region19: #{tpu_custom_call.1} parent=1 // pred_check_branch
      %50 = sbr.rel (0) target = $region21
    $region20: #{tpu_custom_call.1} parent=1 // pred_region
      _
    $region21: #{tpu_custom_call.1} parent=1 // pred_fallthru
      _
    // Predicated region
    $region22: #{tpu_custom_call.1} parent=1 // pred_check
      _
    $region23: #{tpu_custom_call.1} parent=1 // pred_check_branch
      %52 = sbr.rel (0) target = $region25
    $region24: #{tpu_custom_call.1} parent=1 // pred_region
      %53 = dma.done [#allocation3], 128
    $region25: #{tpu_custom_call.1} parent=1 // pred_fallthru
      _
    // Predicated region
    $region26: #{tpu_custom_call.1} parent=1 // pred_check
      _
    $region27: #{tpu_custom_call.1} parent=1 // pred_check_branch
      %55 = sbr.rel (0) target = $region29
    $region28: #{tpu_custom_call.1} parent=1 // pred_region
      %56 = dma.done [#allocation6], 2048
    $region29: #{tpu_custom_call.1} parent=1 // pred_fallthru
      _
    // Predicated region
    $region30: #{tpu_custom_call.1} parent=1 // pred_check
      _
    $region31: #{tpu_custom_call.1} parent=1 // pred_check_branch
      %58 = sbr.rel (0) target = $region33
    $region32: #{tpu_custom_call.1} parent=1 // pred_region
      %59 = dma.done [#allocation6], 2048
    $region33: #{tpu_custom_call.1} parent=1 // pred_fallthru
      _
    %v60 = vld [vmem:[#allocation2] sm:$0xff]
    %v61 = vld [vmem:[#allocation5] sm:$0xff]
    %v62 = vld [vmem:[#allocation5 + $0x8] sm:$0xff]
    %v63 = vld [vmem:[#allocation5 + $0x10] sm:$0xff]
    %v64 = vld [vmem:[#allocation5 + $0x18] sm:$0xff]
    %v65 = vld [vmem:[#allocation5 + $0x20] sm:$0xff]
    %v66 = vld [vmem:[#allocation5 + $0x28] sm:$0xff]
    %v67 = vld [vmem:[#allocation5 + $0x30] sm:$0xff]
    %v68 = vld [vmem:[#allocation5 + $0x38] sm:$0xff]
    %v69 = vld [vmem:[#allocation5 + $0x40] sm:$0xff]
    %v70 = vld [vmem:[#allocation5 + $0x48] sm:$0xff]
    %v71 = vld [vmem:[#allocation5 + $0x50] sm:$0xff]
    %v72 = vld [vmem:[#allocation5 + $0x58] sm:$0xff]
    %v73 = vld [vmem:[#allocation5 + $0x60] sm:$0xff]
    %v74 = vld [vmem:[#allocation5 + $0x68] sm:$0xff]
    %v75 = vld [vmem:[#allocation5 + $0x70] sm:$0xff]
    %v76 = vld [vmem:[#allocation5 + $0x78] sm:$0xff]
    %v77 = vld [vmem:[#allocation7] sm:$0xff]
    %v78 = vld [vmem:[#allocation7 + $0x8] sm:$0xff]
    %v79 = vld [vmem:[#allocation7 + $0x10] sm:$0xff]
    %v80 = vld [vmem:[#allocation7 + $0x18] sm:$0xff]
    %v81 = vld [vmem:[#allocation7 + $0x20] sm:$0xff]
    %v82 = vld [vmem:[#allocation7 + $0x28] sm:$0xff]
    %v83 = vld [vmem:[#allocation7 + $0x30] sm:$0xff]
    %v84 = vld [vmem:[#allocation7 + $0x38] sm:$0xff]
    %v85 = vld [vmem:[#allocation7 + $0x40] sm:$0xff]
    %v86 = vld [vmem:[#allocation7 + $0x48] sm:$0xff]
    %v87 = vld [vmem:[#allocation7 + $0x50] sm:$0xff]
    %v88 = vld [vmem:[#allocation7 + $0x58] sm:$0xff]
    %v89 = vld [vmem:[#allocation7 + $0x60] sm:$0xff]
    %v90 = vld [vmem:[#allocation7 + $0x68] sm:$0xff]
    %v91 = vld [vmem:[#allocation7 + $0x70] sm:$0xff]
    %v92 = vld [vmem:[#allocation7 + $0x78] sm:$0xff]
    %93 = vmatprep.subr.mxu0 0.0
    %94 = vmatpush1.msra.mxu0 %v76
    %95 = vmatprep.subr.mxu0 0.0
    %96 = vmatpush1.msra.mxu0 %v75
    %97 = vmatprep.subr.mxu0 0.0
    %98 = vmatpush1.msra.mxu0 %v74
    %99 = vmatprep.subr.mxu0 0.0
    %100 = vmatpush1.msra.mxu0 %v73
    %101 = vmatprep.subr.mxu0 0.0
    %102 = vmatpush1.msra.mxu0 %v72
    %103 = vmatprep.subr.mxu0 0.0
    %104 = vmatpush1.msra.mxu0 %v71
    %105 = vmatprep.subr.mxu0 0.0
    %106 = vmatpush1.msra.mxu0 %v70
    %107 = vmatprep.subr.mxu0 0.0
    %108 = vmatpush1.msra.mxu0 %v69
    %109 = vmatprep.subr.mxu0 0.0
    %110 = vmatpush1.msra.mxu0 %v68
    %111 = vmatprep.subr.mxu0 0.0
    %112 = vmatpush1.msra.mxu0 %v67
    %113 = vmatprep.subr.mxu0 0.0
    %114 = vmatpush1.msra.mxu0 %v66
    %115 = vmatprep.subr.mxu0 0.0
    %116 = vmatpush1.msra.mxu0 %v65
    %117 = vmatprep.subr.mxu0 0.0
    %118 = vmatpush1.msra.mxu0 %v64
    %119 = vmatprep.subr.mxu0 0.0
    %120 = vmatpush1.msra.mxu0 %v63
    %121 = vmatprep.subr.mxu0 0.0
    %122 = vmatpush1.msra.mxu0 %v62
    %123 = vmatprep.subr.mxu0 0.0
    %124 = vmatpush1.msra.mxu0 %v61
    %125 = vmatprep.subr.mxu0 0.0
    %126 = vmatpush2.msra.mxu0 0.0
    %127 = vmatprep.subr.mxu0 0.0
    %128 = vmatpush2.msra.mxu0 0.0
    %129 = vmatprep.subr.mxu0 0.0
    %130 = vmatpush2.msra.mxu0 0.0
    %131 = vmatprep.subr.mxu0 0.0
    %132 = vmatpush2.msra.mxu0 0.0
    %133 = vmatprep.subr.mxu0 0.0
    %134 = vmatpush2.msra.mxu0 0.0
    %135 = vmatprep.subr.mxu0 0.0
    %136 = vmatpush2.msra.mxu0 0.0
    %137 = vmatprep.subr.mxu0 0.0
    %138 = vmatpush2.msra.mxu0 0.0
    %139 = vmatprep.subr.mxu0 0.0
    %140 = vmatpush2.msra.mxu0 0.0
    %141 = vmatprep.subr.mxu0 0.0
    %142 = vmatpush2.msra.mxu0 0.0
    %143 = vmatprep.subr.mxu0 0.0
    %144 = vmatpush2.msra.mxu0 0.0
    %145 = vmatprep.subr.mxu0 0.0
    %146 = vmatpush2.msra.mxu0 0.0
    %147 = vmatprep.subr.mxu0 0.0
    %148 = vmatpush2.msra.mxu0 0.0
    %149 = vmatprep.subr.mxu0 0.0
    %150 = vmatpush2.msra.mxu0 0.0
    %151 = vmatprep.subr.mxu0 0.0
    %152 = vmatpush2.msra.mxu0 0.0
    %153 = vmatprep.subr.mxu0 0.0
    %154 = vmatpush2.msra.mxu0 0.0
    %155 = vmatprep.subr.mxu0 0.0
    %156 = vmatpush2.msra.mxu0 0.0
    %157 = vmatprep.mubr.f32.mxu0 0.0
    %158 = vmatmul.mubr.f32.gmra.mxu0 %v60
    %v159 = vpop.f32.mrf.mxu0
    %v160 = vadd.f32 0.0, %v159
    %v161 = vpop.f32.mrf.mxu0
    %162 = vdwg.mxu0
    %v163 = vmul.f32 %v160, 0.5
    %v164 = vmul.f32 %v160, 0.70710677
    %v165 = verf.f32.pop %v164
    %v166 = vadd.f32 %v165, 1.0
    %v167 = vmul.f32 %v163, %v166
    %168 = vmatprep.subr.mxu0 0.0
    %169 = vmatpush1.msra.mxu0 %v92
    %170 = vmatprep.subr.mxu0 0.0
    %171 = vmatpush1.msra.mxu0 %v91
    %172 = vmatprep.subr.mxu0 0.0
    %173 = vmatpush1.msra.mxu0 %v90
    %174 = vmatprep.subr.mxu0 0.0
    %175 = vmatpush1.msra.mxu0 %v89
    %176 = vmatprep.subr.mxu0 0.0
    %177 = vmatpush1.msra.mxu0 %v88
    %178 = vmatprep.subr.mxu0 0.0
    %179 = vmatpush1.msra.mxu0 %v87
    %180 = vmatprep.subr.mxu0 0.0
    %181 = vmatpush1.msra.mxu0 %v86
    %182 = vmatprep.subr.mxu0 0.0
    %183 = vmatpush1.msra.mxu0 %v85
    %184 = vmatprep.subr.mxu0 0.0
    %185 = vmatpush1.msra.mxu0 %v84
    %186 = vmatprep.subr.mxu0 0.0
    %187 = vmatpush1.msra.mxu0 %v83
    %188 = vmatprep.subr.mxu0 0.0
    %189 = vmatpush1.msra.mxu0 %v82
    %190 = vmatprep.subr.mxu0 0.0
    %191 = vmatpush1.msra.mxu0 %v81
    %192 = vmatprep.subr.mxu0 0.0
    %193 = vmatpush1.msra.mxu0 %v80
    %194 = vmatprep.subr.mxu0 0.0
    %195 = vmatpush1.msra.mxu0 %v79
    %196 = vmatprep.subr.mxu0 0.0
    %197 = vmatpush1.msra.mxu0 %v78
    %198 = vmatprep.subr.mxu0 0.0
    %199 = vmatpush1.msra.mxu0 %v77
    %200 = vmatprep.subr.mxu0 0.0
    %201 = vmatpush2.msra.mxu0 0.0
    %202 = vmatprep.subr.mxu0 0.0
    %203 = vmatpush2.msra.mxu0 0.0
    %204 = vmatprep.subr.mxu0 0.0
    %205 = vmatpush2.msra.mxu0 0.0
    %206 = vmatprep.subr.mxu0 0.0
    %207 = vmatpush2.msra.mxu0 0.0
    %208 = vmatprep.subr.mxu0 0.0
    %209 = vmatpush2.msra.mxu0 0.0
    %210 = vmatprep.subr.mxu0 0.0
    %211 = vmatpush2.msra.mxu0 0.0
    %212 = vmatprep.subr.mxu0 0.0
    %213 = vmatpush2.msra.mxu0 0.0
    %214 = vmatprep.subr.mxu0 0.0
    %215 = vmatpush2.msra.mxu0 0.0
    %216 = vmatprep.subr.mxu0 0.0
    %217 = vmatpush2.msra.mxu0 0.0
    %218 = vmatprep.subr.mxu0 0.0
    %219 = vmatpush2.msra.mxu0 0.0
    %220 = vmatprep.subr.mxu0 0.0
    %221 = vmatpush2.msra.mxu0 0.0
    %222 = vmatprep.subr.mxu0 0.0
    %223 = vmatpush2.msra.mxu0 0.0
    %224 = vmatprep.subr.mxu0 0.0
    %225 = vmatpush2.msra.mxu0 0.0
    %226 = vmatprep.subr.mxu0 0.0
    %227 = vmatpush2.msra.mxu0 0.0
    %228 = vmatprep.subr.mxu0 0.0
    %229 = vmatpush2.msra.mxu0 0.0
    %230 = vmatprep.subr.mxu0 0.0
    %231 = vmatpush2.msra.mxu0 0.0
    %232 = vmatprep.mubr.f32.mxu0 0.0
    %233 = vmatmul.mubr.f32.gmra.mxu0 %v167
    %v234 = vpop.f32.mrf.mxu0
    %v235 = vadd.f32 0.0, %v234
    %v236 = vpop.f32.mrf.mxu0
    %237 = vdwg.mxu0
    %v238 = vadd.f32 %v160, %v235
    %239 = vadd.xlane.f32.xlu0 %v238
    %v240 = vpop.xlane.xlu0 %239
    %v241 = vmul.f32 %v240, 0.015625
    %v242 = vsub.f32 %v238, %v241
    %v243 = vlaneseq
    %v244 = vand.u32 %v243, 127
    %vm245 = vcmp.lt.s32.totalorder %v244, 64
    %v246 = vsel %vm245, %v242, 0.0
    %v247 = vmul.f32 %v246, %v246
    %248 = vadd.xlane.f32.xlu0 %v247
    %v249 = vpop.xlane.xlu0 %248
    %v250 = vmul.f32 %v249, 0.015625
    %v251 = vadd.f32 %v250, 1e-05
    %v252 = vrsqrt.pop %v251
    %v253 = vmul.f32 %v246, %v252
    %v254 = vld [vmem:[%s3] sm:$0x1]
    %v255 = vld [vmem:[%s4] sm:$0x1]
    %v257 = vlaneseq
    %v258 = vshrl.u32 %v257, 7
    %v259 = vsub.s32 0, %v258
    %v260 = vrot.slane %v254, %v259
    %v262 = vmul.f32 %v253, %v260
    %v264 = vlaneseq
    %v265 = vshrl.u32 %v264, 7
    %v266 = vsub.s32 0, %v265
    %v267 = vrot.slane %v255, %v266
    %v269 = vadd.f32 %v262, %v267
    %270 = vst [vmem:[#allocation8] sm:$0xff] %v269
    // Predicated region
    $region34: #{tpu_custom_call.1} parent=1 // pred_check
      _
    $region35: #{tpu_custom_call.1} parent=1 // pred_check_branch
      %272 = sbr.rel (0) target = $region37
    $region36: #{tpu_custom_call.1} parent=1 // pred_region
      %s274 = ssub.s32 128, 128
      %275 = vsyncadd [#allocation4], %s274
      %s277 = sshll.u32 [#allocation8], 4
      %s278 = int_to_ptr.vmem [resolvable:$true] %s277
      %280 = dma.vmem_to_hbm [thread:$0]  %s278, 128, %s5, [#allocation4]
    $region37: #{tpu_custom_call.1} parent=1 // pred_fallthru
      _
    // Predicated region
    $region38: #{tpu_custom_call.1} parent=1 // pred_check
      _
    $region39: #{tpu_custom_call.1} parent=1 // pred_check_branch
      %282 = sbr.rel (0) target = $region41
    $region40: #{tpu_custom_call.1} parent=1 // pred_region
      %283 = dma.done [#allocation4], 128
    $region41: #{tpu_custom_call.1} parent=1 // pred_fallthru
      _
    %284 = vsyncpa [#allocation3], 1
    %285 = vsyncpa [#allocation6], 1
    %286 = vsyncpa [#allocation4], 1

</llo_original>
